<compile_context>
chip_gen: v6e
topology: v6e:2x2x1
jax: 0.10.0
libtpu: 0.0.40
codegen_flags: <defaults>
</compile_context>

<pallas_src>
import functools

import jax
import jax.numpy as jnp
from jax.experimental import pallas as pl
from jax.experimental.pallas import tpu as pltpu

NEG_SLOPE = 0.01   # nn.LeakyReLU(0.01)
BN_EPS = 1e-5      # nn.BatchNorm2d default eps


def _batch_norm(y, gamma, beta):
    """Training-mode BatchNorm2d in (channel, pixel) layout.

    y: (Fp, N) f32; gamma/beta: (Fp, 1). Biased batch statistics per channel
    (row), reduced along the lane axis; centered value reused for the variance.
    """
    mu = jnp.mean(y, axis=1, keepdims=True)             # (Fp, 1)  lane reduce
    d = y - mu
    var = jnp.mean(d * d, axis=1, keepdims=True)        # (Fp, 1)
    return d * (jax.lax.rsqrt(var + BN_EPS) * gamma) + beta


def _single_block_kernel(
    xcol_ref,    # (KS*KS*C, N)   im2col of padded input (built in wrapper)
    xres_ref,    # (Fp, N)        input in (channel, pixel) layout, residual add
    mask_ref,    # (KS*KS, N)     conv2 'same'-padding validity masks (f32 0/1)
    w1_ref,      # (Fp, KS*KS*C)  conv1 weight, out-channel major
    w2_ref,      # (Fp, KS*KS*Fp) conv2 weight, out-channel major
    p_ref,       # (Fp, 4)        columns = [gamma1, beta1, gamma2, beta2]
    o_ref,       # (Fp, N)        output, (channel, pixel) layout
    ybuf_ref,    # scratch (Fp, 2N): bn1+act output replicated twice along lanes
    col2_ref,    # scratch (KS*KS*Fp, N): conv2 im2col
    *,
    H, W, KS, P, N, Fp,
):
    # ---- conv1: one (Fp, K1) x (K1, N) MXU matmul ----
    y = jnp.dot(w1_ref[...], xcol_ref[...], preferred_element_type=jnp.float32)

    # ---- bn1 + LeakyReLU (channels on sublanes, pixels on lanes) ----
    y = _batch_norm(y, p_ref[:, 0:1], p_ref[:, 1:2])
    y = jnp.where(y > 0, y, NEG_SLOPE * y)

    # ---- conv2 im2col: lane-shifted views of y, boundary taps masked ----
    # ybuf holds y twice so a spatial shift becomes an aligned store + a
    # lane-offset load; the 0/1 masks zero the pixels whose tap falls outside
    # the image, which IS conv2's 'same' zero padding.
    ybuf_ref[:, 0:N] = y
    ybuf_ref[:, N:2 * N] = y
    for kh in range(KS):
        for kw in range(KS):
            t = kh * KS + kw
            dh, dw = kh - P, kw - P
            if dh == 0 and dw == 0:
                col2_ref[t * Fp:(t + 1) * Fp, :] = y          # center tap: as-is
            else:
                off = (dh * W + dw) % N
                piece = ybuf_ref[:, off:off + N] * mask_ref[t:t + 1, :]
                col2_ref[t * Fp:(t + 1) * Fp, :] = piece      # 8-sublane aligned

    # ---- conv2: one (Fp, K2) x (K2, N) MXU matmul ----
    y2 = jnp.dot(w2_ref[...], col2_ref[...], preferred_element_type=jnp.float32)

    # ---- bn2 + residual add; fully aligned lane-dense store ----
    y2 = _batch_norm(y2, p_ref[:, 2:3], p_ref[:, 3:4])
    o_ref[...] = (xres_ref[...] + y2).astype(o_ref.dtype)


@jax.jit
def single_block_pallas(x, w1, g1, beta1, w2, g2, beta2):
    """x: (B, C, H, W); w1: (F, C, KS, KS); w2: (F, F, KS, KS); g*/beta*: (F,).

    Valid for stride=1 and filters == in_channels (the only configuration for
    which the module's residual add is shape-valid).
    """
    B, C, H, W = x.shape
    F, c_in, KS, ks2 = w1.shape
    assert (c_in, ks2) == (C, KS)
    assert w2.shape == (F, F, KS, KS)
    assert F == C, "residual add requires filters == in_channels"
    P = (KS - 1) // 2
    N = B * H * W
    Fp = max(8, ((F + 7) // 8) * 8)      # pad channels to a full sublane group
    K1 = KS * KS * C
    K2 = KS * KS * Fp

    xf = x.astype(jnp.float32)

    # conv1 im2col (hoisted to XLA): (KS*KS*C, B*H*W), pixels on lanes.
    x_pad = jnp.pad(xf, ((0, 0), (0, 0), (P, P), (P, P)))
    taps = [x_pad[:, :, kh:kh + H, kw:kw + W]
            for kh in range(KS) for kw in range(KS)]
    x_col = jnp.stack(taps, axis=0)                      # (KS*KS, B, C, H, W)
    x_col = x_col.transpose(0, 2, 1, 3, 4).reshape(K1, N)

    # Residual input in (channel, pixel) layout, channel-padded to Fp.
    x_res = jnp.pad(xf, ((0, 0), (0, Fp - C), (0, 0), (0, 0)))
    x_res = x_res.transpose(1, 0, 2, 3).reshape(Fp, N)

    # conv2 'same'-padding validity masks per tap over the flat pixel index
    # (constant-folded by XLA into a literal input).
    c_idx = jnp.arange(N, dtype=jnp.int32)
    hh = (c_idx // W) % H
    ww = c_idx % W
    masks = []
    for kh in range(KS):
        for kw in range(KS):
            dh, dw = kh - P, kw - P
            valid = ((hh + dh >= 0) & (hh + dh < H) &
                     (ww + dw >= 0) & (ww + dw < W))
            masks.append(valid.astype(jnp.float32))
    mask_arr = jnp.stack(masks, axis=0)                  # (KS*KS, N)

    # Weights as (out_ch, tap*in_ch) matrices, output channels zero-padded to Fp.
    w1_mat = jnp.pad(w1.astype(jnp.float32),
                     ((0, Fp - F), (0, 0), (0, 0), (0, 0)))
    w1_mat = w1_mat.transpose(0, 2, 3, 1).reshape(Fp, K1)
    w2_mat = jnp.pad(w2.astype(jnp.float32),
                     ((0, Fp - F), (0, Fp - F), (0, 0), (0, 0)))
    w2_mat = w2_mat.transpose(0, 2, 3, 1).reshape(Fp, K2)

    # BN affine params packed into one tiny input: columns [g1, b1, g2, b2].
    params = jnp.stack([g1, beta1, g2, beta2], axis=1).astype(jnp.float32)
    params = jnp.pad(params, ((0, Fp - F), (0, 0)))      # (Fp, 4)

    kernel = functools.partial(
        _single_block_kernel, H=H, W=W, KS=KS, P=P, N=N, Fp=Fp)

    flops = 2 * N * Fp * (K1 + K2)
    bytes_accessed = 4 * (x_col.size + x_res.size + mask_arr.size
                          + w1_mat.size + w2_mat.size + params.size + Fp * N)

    out = pl.pallas_call(
        kernel,
        out_shape=jax.ShapeDtypeStruct((Fp, N), x.dtype),
        grid_spec=pltpu.PrefetchScalarGridSpec(
            num_scalar_prefetch=0,
            grid=(1,),                       # everything is VMEM-resident
            in_specs=[
                pl.BlockSpec((K1, N), lambda i: (0, 0)),
                pl.BlockSpec((Fp, N), lambda i: (0, 0)),
                pl.BlockSpec((KS * KS, N), lambda i: (0, 0)),
                pl.BlockSpec((Fp, K1), lambda i: (0, 0)),
                pl.BlockSpec((Fp, K2), lambda i: (0, 0)),
                pl.BlockSpec((Fp, 4), lambda i: (0, 0)),
            ],
            out_specs=pl.BlockSpec((Fp, N), lambda i: (0, 0)),
            scratch_shapes=[
                pltpu.VMEM((Fp, 2 * N), jnp.float32),
                pltpu.VMEM((K2, N), jnp.float32),
            ],
        ),
        compiler_params=pltpu.CompilerParams(
            dimension_semantics=("arbitrary",)),
        cost_estimate=pl.CostEstimate(
            flops=flops, transcendentals=0, bytes_accessed=bytes_accessed),
    )(x_col, x_res, mask_arr, w1_mat, w2_mat, params)

    # (Fp, B*H*W) channel-major flat -> (B, C, H, W); tiny (8 KB) XLA transpose.
    return out[:C].reshape(C, B, H, W).transpose(1, 0, 2, 3)


def single_block_ref(x, w1, g1, beta1, w2, g2, beta2):
    """Plain-JAX reference with identical semantics (training-mode batch norm)."""
    P = (w1.shape[-1] - 1) // 2

    def conv(v, w):
        return jax.lax.conv_general_dilated(
            v, w, window_strides=(1, 1), padding=((P, P), (P, P)),
            dimension_numbers=("NCHW", "OIHW", "NCHW"),
            precision=jax.lax.Precision.HIGHEST)

    def bn(v, g, b):
        mu = jnp.mean(v, axis=(0, 2, 3), keepdims=True)
        var = jnp.mean(jnp.square(v - mu), axis=(0, 2, 3), keepdims=True)
        return (v - mu) * jax.lax.rsqrt(var + BN_EPS) * g.reshape(1, -1, 1, 1) \
            + b.reshape(1, -1, 1, 1)

    y = conv(x, w1)
    y = bn(y, g1, beta1)
    y = jnp.where(y > 0, y, NEG_SLOPE * y)
    y = conv(y, w2)
    y = bn(y, g2, beta2)
    return x + y


if __name__ == "__main__":
    # single_block(in_channels=4, filters=4, size=3, stride=1) on (2,4,16,16).
    B, C, H, W = 2, 4, 16, 16
    filters, size = C, 3

    key = jax.random.PRNGKey(0)
    kx, k1, k2, kg1, kb1, kg2, kb2 = jax.random.split(key, 7)

    bound1 = 1.0 / (C * size * size) ** 0.5
    bound2 = 1.0 / (filters * size * size) ** 0.5
    x = jax.random.normal(kx, (B, C, H, W), jnp.float32)
    w1 = jax.random.uniform(k1, (filters, C, size, size), jnp.float32, -bound1, bound1)
    w2 = jax.random.uniform(k2, (filters, filters, size, size), jnp.float32, -bound2, bound2)
    g1 = 1.0 + 0.1 * jax.random.normal(kg1, (filters,), jnp.float32)
    b1 = 0.1 * jax.random.normal(kb1, (filters,), jnp.float32)
    g2 = 1.0 + 0.1 * jax.random.normal(kg2, (filters,), jnp.float32)
    b2 = 0.1 * jax.random.normal(kb2, (filters,), jnp.float32)

    y = single_block_pallas(x, w1, g1, b1, w2, g2, b2)
    jax.block_until_ready(y)

    y_ref = single_block_ref(x, w1, g1, b1, w2, g2, b2)
    assert y.shape == (B, C, H, W)
    assert jnp.allclose(y, y_ref, atol=5e-4, rtol=5e-4), \
        float(jnp.max(jnp.abs(y - y_ref)))

    # TODO(synk): BatchNorm running_mean/running_var buffer updates (a training
    # side effect, not part of the returned tensor) are not reproduced.
    print("KERNEL_OK")
</pallas_src>

<mosaic_0001>
module attributes {stable_mosaic.version = 11 : i64} {
  func.func @_single_block_kernel(%arg0: i32, %arg1: memref<36x512xf32, #tpu.memory_space<vmem>>, %arg2: memref<8x512xf32, #tpu.memory_space<vmem>>, %arg3: memref<9x512xf32, #tpu.memory_space<vmem>>, %arg4: memref<8x36xf32, #tpu.memory_space<vmem>>, %arg5: memref<8x72xf32, #tpu.memory_space<vmem>>, %arg6: memref<8x4xf32, #tpu.memory_space<vmem>>, %arg7: memref<8x512xf32, #tpu.memory_space<vmem>>, %arg8: memref<8x1024xf32, #tpu.memory_space<vmem>>, %arg9: memref<72x512xf32, #tpu.memory_space<vmem>>) attributes {dimension_semantics = [#tpu.dimension_semantics<arbitrary>], iteration_bounds = array<i64: 1>, scalar_prefetch = 0 : i64, scratch_operands = 2 : i64, tpu.core_type = #tpu.core_type<tc>, window_params = [{pipeline_mode = #tpu.pipeline_mode<synchronous>, transform_indices = @transform_0, window_bounds = array<i64: 36, 512>}, {pipeline_mode = #tpu.pipeline_mode<synchronous>, transform_indices = @transform_1, window_bounds = array<i64: 8, 512>}, {pipeline_mode = #tpu.pipeline_mode<synchronous>, transform_indices = @transform_2, window_bounds = array<i64: 9, 512>}, {pipeline_mode = #tpu.pipeline_mode<synchronous>, transform_indices = @transform_3, window_bounds = array<i64: 8, 36>}, {pipeline_mode = #tpu.pipeline_mode<synchronous>, transform_indices = @transform_4, window_bounds = array<i64: 8, 72>}, {pipeline_mode = #tpu.pipeline_mode<synchronous>, transform_indices = @transform_5, window_bounds = array<i64: 8, 4>}, {pipeline_mode = #tpu.pipeline_mode<synchronous>, transform_indices = @transform_6, window_bounds = array<i64: 8, 512>}]} {
    %c0 = arith.constant 0 : index
    %c0_0 = arith.constant 0 : index
    %0 = vector.load %arg4[%c0, %c0_0] : memref<8x36xf32, #tpu.memory_space<vmem>>, vector<8x36xf32>
    %c0_1 = arith.constant 0 : index
    %c0_2 = arith.constant 0 : index
    %1 = vector.load %arg1[%c0_1, %c0_2] : memref<36x512xf32, #tpu.memory_space<vmem>>, vector<36x512xf32>
    %cst = arith.constant dense<0.000000e+00> : vector<8x512xf32>
    %2 = tpu.matmul %0, %1, %cst {dimension_numbers = #tpu.dot_dimension_numbers<[1], [0], [0], [1], [0, 0, 1, 1], [], []>} : vector<8x36xf32>, vector<36x512xf32>, vector<8x512xf32> -> vector<8x512xf32>
    %c0_3 = arith.constant 0 : index
    %c0_4 = arith.constant 0 : index
    %3 = vector.load %arg6[%c0_3, %c0_4] : memref<8x4xf32, #tpu.memory_space<vmem>>, vector<8x1xf32>
    %c0_5 = arith.constant 0 : index
    %c1 = arith.constant 1 : index
    %4 = vector.load %arg6[%c0_5, %c1] : memref<8x4xf32, #tpu.memory_space<vmem>>, vector<8x1xf32>
    %cst_6 = arith.constant dense<0.000000e+00> : vector<8xf32>
    %5 = vector.multi_reduction <add>, %2, %cst_6 [1] : vector<8x512xf32> to vector<8xf32>
    %6 = vector.shape_cast %5 : vector<8xf32> to vector<8x1xf32>
    %cst_7 = arith.constant 5.120000e+02 : f32
    %7 = vector.broadcast %cst_7 : f32 to vector<8x1xf32>
    %8 = arith.divf %6, %7 : vector<8x1xf32>
    %9 = vector.broadcast %8 : vector<8x1xf32> to vector<8x512xf32>
    %10 = arith.subf %2, %9 : vector<8x512xf32>
    %11 = arith.mulf %10, %10 : vector<8x512xf32>
    %cst_8 = arith.constant dense<0.000000e+00> : vector<8xf32>
    %12 = vector.multi_reduction <add>, %11, %cst_8 [1] : vector<8x512xf32> to vector<8xf32>
    %13 = vector.shape_cast %12 : vector<8xf32> to vector<8x1xf32>
    %cst_9 = arith.constant 5.120000e+02 : f32
    %14 = vector.broadcast %cst_9 : f32 to vector<8x1xf32>
    %15 = arith.divf %13, %14 : vector<8x1xf32>
    %cst_10 = arith.constant 9.99999974E-6 : f32
    %16 = vector.broadcast %cst_10 : f32 to vector<8x1xf32>
    %17 = arith.addf %15, %16 : vector<8x1xf32>
    %18 = math.rsqrt %17 : vector<8x1xf32>
    %19 = arith.mulf %18, %3 : vector<8x1xf32>
    %20 = vector.broadcast %19 : vector<8x1xf32> to vector<8x512xf32>
    %21 = arith.mulf %10, %20 : vector<8x512xf32>
    %22 = vector.broadcast %4 : vector<8x1xf32> to vector<8x512xf32>
    %23 = arith.addf %21, %22 : vector<8x512xf32>
    %cst_11 = arith.constant 0.000000e+00 : f32
    %24 = vector.broadcast %cst_11 : f32 to vector<8x512xf32>
    %25 = arith.cmpf ogt, %23, %24 : vector<8x512xf32>
    %cst_12 = arith.constant 0.00999999977 : f32
    %26 = vector.broadcast %cst_12 : f32 to vector<8x512xf32>
    %27 = arith.mulf %26, %23 : vector<8x512xf32>
    %28 = arith.select %25, %23, %27 : vector<8x512xi1>, vector<8x512xf32>
    %c0_13 = arith.constant 0 : index
    %c0_14 = arith.constant 0 : index
    %29 = vector.load %arg8[%c0_13, %c0_14] : memref<8x1024xf32, #tpu.memory_space<vmem>>, vector<8x512xf32>
    tpu.vector_store %arg8[%c0_13, %c0_14], %28 {strides = array<i32>} : memref<8x1024xf32, #tpu.memory_space<vmem>>, vector<8x512xf32>,
    %c0_15 = arith.constant 0 : index
    %c512 = arith.constant 512 : index
    %30 = vector.load %arg8[%c0_15, %c512] : memref<8x1024xf32, #tpu.memory_space<vmem>>, vector<8x512xf32>
    tpu.vector_store %arg8[%c0_15, %c512], %28 {strides = array<i32>} : memref<8x1024xf32, #tpu.memory_space<vmem>>, vector<8x512xf32>,
    %c0_16 = arith.constant 0 : index
    %c495 = arith.constant 495 : index
    %31 = vector.load %arg8[%c0_16, %c495] : memref<8x1024xf32, #tpu.memory_space<vmem>>, vector<8x512xf32>
    %c0_17 = arith.constant 0 : index
    %c0_18 = arith.constant 0 : index
    %32 = vector.load %arg3[%c0_17, %c0_18] : memref<9x512xf32, #tpu.memory_space<vmem>>, vector<1x512xf32>
    %33 = vector.broadcast %32 : vector<1x512xf32> to vector<8x512xf32>
    %34 = arith.mulf %31, %33 : vector<8x512xf32>
    %c0_19 = arith.constant 0 : index
    %c0_20 = arith.constant 0 : index
    %35 = vector.load %arg9[%c0_19, %c0_20] : memref<72x512xf32, #tpu.memory_space<vmem>>, vector<8x512xf32>
    tpu.vector_store %arg9[%c0_19, %c0_20], %34 {strides = array<i32>} : memref<72x512xf32, #tpu.memory_space<vmem>>, vector<8x512xf32>,
    %c0_21 = arith.constant 0 : index
    %c496 = arith.constant 496 : index
    %36 = vector.load %arg8[%c0_21, %c496] : memref<8x1024xf32, #tpu.memory_space<vmem>>, vector<8x512xf32>
    %c1_22 = arith.constant 1 : index
    %c0_23 = arith.constant 0 : index
    %37 = vector.load %arg3[%c1_22, %c0_23] : memref<9x512xf32, #tpu.memory_space<vmem>>, vector<1x512xf32>
    %38 = vector.broadcast %37 : vector<1x512xf32> to vector<8x512xf32>
    %39 = arith.mulf %36, %38 : vector<8x512xf32>
    %c8 = arith.constant 8 : index
    %c0_24 = arith.constant 0 : index
    %40 = vector.load %arg9[%c8, %c0_24] : memref<72x512xf32, #tpu.memory_space<vmem>>, vector<8x512xf32>
    tpu.vector_store %arg9[%c8, %c0_24], %39 {strides = array<i32>} : memref<72x512xf32, #tpu.memory_space<vmem>>, vector<8x512xf32>,
    %c0_25 = arith.constant 0 : index
    %c497 = arith.constant 497 : index
    %41 = vector.load %arg8[%c0_25, %c497] : memref<8x1024xf32, #tpu.memory_space<vmem>>, vector<8x512xf32>
    %c2 = arith.constant 2 : index
    %c0_26 = arith.constant 0 : index
    %42 = vector.load %arg3[%c2, %c0_26] : memref<9x512xf32, #tpu.memory_space<vmem>>, vector<1x512xf32>
    %43 = vector.broadcast %42 : vector<1x512xf32> to vector<8x512xf32>
    %44 = arith.mulf %41, %43 : vector<8x512xf32>
    %c16 = arith.constant 16 : index
    %c0_27 = arith.constant 0 : index
    %45 = vector.load %arg9[%c16, %c0_27] : memref<72x512xf32, #tpu.memory_space<vmem>>, vector<8x512xf32>
    tpu.vector_store %arg9[%c16, %c0_27], %44 {strides = array<i32>} : memref<72x512xf32, #tpu.memory_space<vmem>>, vector<8x512xf32>,
    %c0_28 = arith.constant 0 : index
    %c511 = arith.constant 511 : index
    %46 = vector.load %arg8[%c0_28, %c511] : memref<8x1024xf32, #tpu.memory_space<vmem>>, vector<8x512xf32>
    %c3 = arith.constant 3 : index
    %c0_29 = arith.constant 0 : index
    %47 = vector.load %arg3[%c3, %c0_29] : memref<9x512xf32, #tpu.memory_space<vmem>>, vector<1x512xf32>
    %48 = vector.broadcast %47 : vector<1x512xf32> to vector<8x512xf32>
    %49 = arith.mulf %46, %48 : vector<8x512xf32>
    %c24 = arith.constant 24 : index
    %c0_30 = arith.constant 0 : index
    %50 = vector.load %arg9[%c24, %c0_30] : memref<72x512xf32, #tpu.memory_space<vmem>>, vector<8x512xf32>
    tpu.vector_store %arg9[%c24, %c0_30], %49 {strides = array<i32>} : memref<72x512xf32, #tpu.memory_space<vmem>>, vector<8x512xf32>,
    %c32 = arith.constant 32 : index
    %c0_31 = arith.constant 0 : index
    %51 = vector.load %arg9[%c32, %c0_31] : memref<72x512xf32, #tpu.memory_space<vmem>>, vector<8x512xf32>
    tpu.vector_store %arg9[%c32, %c0_31], %28 {strides = array<i32>} : memref<72x512xf32, #tpu.memory_space<vmem>>, vector<8x512xf32>,
    %c0_32 = arith.constant 0 : index
    %c1_33 = arith.constant 1 : index
    %52 = vector.load %arg8[%c0_32, %c1_33] : memref<8x1024xf32, #tpu.memory_space<vmem>>, vector<8x512xf32>
    %c5 = arith.constant 5 : index
    %c0_34 = arith.constant 0 : index
    %53 = vector.load %arg3[%c5, %c0_34] : memref<9x512xf32, #tpu.memory_space<vmem>>, vector<1x512xf32>
    %54 = vector.broadcast %53 : vector<1x512xf32> to vector<8x512xf32>
    %55 = arith.mulf %52, %54 : vector<8x512xf32>
    %c40 = arith.constant 40 : index
    %c0_35 = arith.constant 0 : index
    %56 = vector.load %arg9[%c40, %c0_35] : memref<72x512xf32, #tpu.memory_space<vmem>>, vector<8x512xf32>
    tpu.vector_store %arg9[%c40, %c0_35], %55 {strides = array<i32>} : memref<72x512xf32, #tpu.memory_space<vmem>>, vector<8x512xf32>,
    %c0_36 = arith.constant 0 : index
    %c15 = arith.constant 15 : index
    %57 = vector.load %arg8[%c0_36, %c15] : memref<8x1024xf32, #tpu.memory_space<vmem>>, vector<8x512xf32>
    %c6 = arith.constant 6 : index
    %c0_37 = arith.constant 0 : index
    %58 = vector.load %arg3[%c6, %c0_37] : memref<9x512xf32, #tpu.memory_space<vmem>>, vector<1x512xf32>
    %59 = vector.broadcast %58 : vector<1x512xf32> to vector<8x512xf32>
    %60 = arith.mulf %57, %59 : vector<8x512xf32>
    %c48 = arith.constant 48 : index
    %c0_38 = arith.constant 0 : index
    %61 = vector.load %arg9[%c48, %c0_38] : memref<72x512xf32, #tpu.memory_space<vmem>>, vector<8x512xf32>
    tpu.vector_store %arg9[%c48, %c0_38], %60 {strides = array<i32>} : memref<72x512xf32, #tpu.memory_space<vmem>>, vector<8x512xf32>,
    %c0_39 = arith.constant 0 : index
    %c16_40 = arith.constant 16 : index
    %62 = vector.load %arg8[%c0_39, %c16_40] : memref<8x1024xf32, #tpu.memory_space<vmem>>, vector<8x512xf32>
    %c7 = arith.constant 7 : index
    %c0_41 = arith.constant 0 : index
    %63 = vector.load %arg3[%c7, %c0_41] : memref<9x512xf32, #tpu.memory_space<vmem>>, vector<1x512xf32>
    %64 = vector.broadcast %63 : vector<1x512xf32> to vector<8x512xf32>
    %65 = arith.mulf %62, %64 : vector<8x512xf32>
    %c56 = arith.constant 56 : index
    %c0_42 = arith.constant 0 : index
    %66 = vector.load %arg9[%c56, %c0_42] : memref<72x512xf32, #tpu.memory_space<vmem>>, vector<8x512xf32>
    tpu.vector_store %arg9[%c56, %c0_42], %65 {strides = array<i32>} : memref<72x512xf32, #tpu.memory_space<vmem>>, vector<8x512xf32>,
    %c0_43 = arith.constant 0 : index
    %c17 = arith.constant 17 : index
    %67 = vector.load %arg8[%c0_43, %c17] : memref<8x1024xf32, #tpu.memory_space<vmem>>, vector<8x512xf32>
    %c8_44 = arith.constant 8 : index
    %c0_45 = arith.constant 0 : index
    %68 = vector.load %arg3[%c8_44, %c0_45] : memref<9x512xf32, #tpu.memory_space<vmem>>, vector<1x512xf32>
    %69 = vector.broadcast %68 : vector<1x512xf32> to vector<8x512xf32>
    %70 = arith.mulf %67, %69 : vector<8x512xf32>
    %c64 = arith.constant 64 : index
    %c0_46 = arith.constant 0 : index
    %71 = vector.load %arg9[%c64, %c0_46] : memref<72x512xf32, #tpu.memory_space<vmem>>, vector<8x512xf32>
    tpu.vector_store %arg9[%c64, %c0_46], %70 {strides = array<i32>} : memref<72x512xf32, #tpu.memory_space<vmem>>, vector<8x512xf32>,
    %c0_47 = arith.constant 0 : index
    %c0_48 = arith.constant 0 : index
    %72 = vector.load %arg5[%c0_47, %c0_48] : memref<8x72xf32, #tpu.memory_space<vmem>>, vector<8x72xf32>
    %c0_49 = arith.constant 0 : index
    %c0_50 = arith.constant 0 : index
    %73 = vector.load %arg9[%c0_49, %c0_50] : memref<72x512xf32, #tpu.memory_space<vmem>>, vector<72x512xf32>
    %cst_51 = arith.constant dense<0.000000e+00> : vector<8x512xf32>
    %74 = tpu.matmul %72, %73, %cst_51 {dimension_numbers = #tpu.dot_dimension_numbers<[1], [0], [0], [1], [0, 0, 1, 1], [], []>} : vector<8x72xf32>, vector<72x512xf32>, vector<8x512xf32> -> vector<8x512xf32>
    %c0_52 = arith.constant 0 : index
    %c2_53 = arith.constant 2 : index
    %75 = vector.load %arg6[%c0_52, %c2_53] : memref<8x4xf32, #tpu.memory_space<vmem>>, vector<8x1xf32>
    %c0_54 = arith.constant 0 : index
    %c3_55 = arith.constant 3 : index
    %76 = vector.load %arg6[%c0_54, %c3_55] : memref<8x4xf32, #tpu.memory_space<vmem>>, vector<8x1xf32>
    %cst_56 = arith.constant dense<0.000000e+00> : vector<8xf32>
    %77 = vector.multi_reduction <add>, %74, %cst_56 [1] : vector<8x512xf32> to vector<8xf32>
    %78 = vector.shape_cast %77 : vector<8xf32> to vector<8x1xf32>
    %cst_57 = arith.constant 5.120000e+02 : f32
    %79 = vector.broadcast %cst_57 : f32 to vector<8x1xf32>
    %80 = arith.divf %78, %79 : vector<8x1xf32>
    %81 = vector.broadcast %80 : vector<8x1xf32> to vector<8x512xf32>
    %82 = arith.subf %74, %81 : vector<8x512xf32>
    %83 = arith.mulf %82, %82 : vector<8x512xf32>
    %cst_58 = arith.constant dense<0.000000e+00> : vector<8xf32>
    %84 = vector.multi_reduction <add>, %83, %cst_58 [1] : vector<8x512xf32> to vector<8xf32>
    %85 = vector.shape_cast %84 : vector<8xf32> to vector<8x1xf32>
    %cst_59 = arith.constant 5.120000e+02 : f32
    %86 = vector.broadcast %cst_59 : f32 to vector<8x1xf32>
    %87 = arith.divf %85, %86 : vector<8x1xf32>
    %cst_60 = arith.constant 9.99999974E-6 : f32
    %88 = vector.broadcast %cst_60 : f32 to vector<8x1xf32>
    %89 = arith.addf %87, %88 : vector<8x1xf32>
    %90 = math.rsqrt %89 : vector<8x1xf32>
    %91 = arith.mulf %90, %75 : vector<8x1xf32>
    %92 = vector.broadcast %91 : vector<8x1xf32> to vector<8x512xf32>
    %93 = arith.mulf %82, %92 : vector<8x512xf32>
    %94 = vector.broadcast %76 : vector<8x1xf32> to vector<8x512xf32>
    %95 = arith.addf %93, %94 : vector<8x512xf32>
    %c0_61 = arith.constant 0 : index
    %c0_62 = arith.constant 0 : index
    %96 = vector.load %arg2[%c0_61, %c0_62] : memref<8x512xf32, #tpu.memory_space<vmem>>, vector<8x512xf32>
    %97 = arith.addf %96, %95 : vector<8x512xf32>
    %c0_63 = arith.constant 0 : index
    %c0_64 = arith.constant 0 : index
    %98 = vector.load %arg7[%c0_63, %c0_64] : memref<8x512xf32, #tpu.memory_space<vmem>>, vector<8x512xf32>
    tpu.vector_store %arg7[%c0_63, %c0_64], %97 {strides = array<i32>} : memref<8x512xf32, #tpu.memory_space<vmem>>, vector<8x512xf32>,
    return
  }
  func.func @transform_0(%arg0: i32) -> (i32, i32) {
    %c0_i32 = arith.constant 0 : i32
    %c0_i32_0 = arith.constant 0 : i32
    %c0_i32_1 = arith.constant 0 : i32
    return %c0_i32, %c0_i32_0 : i32, i32
  }
  func.func @transform_1(%arg0: i32) -> (i32, i32) {
    %c0_i32 = arith.constant 0 : i32
    %c0_i32_0 = arith.constant 0 : i32
    %c0_i32_1 = arith.constant 0 : i32
    return %c0_i32, %c0_i32_0 : i32, i32
  }
  func.func @transform_2(%arg0: i32) -> (i32, i32) {
    %c0_i32 = arith.constant 0 : i32
    %c0_i32_0 = arith.constant 0 : i32
    %c0_i32_1 = arith.constant 0 : i32
    return %c0_i32, %c0_i32_0 : i32, i32
  }
  func.func @transform_3(%arg0: i32) -> (i32, i32) {
    %c0_i32 = arith.constant 0 : i32
    %c0_i32_0 = arith.constant 0 : i32
    %c0_i32_1 = arith.constant 0 : i32
    return %c0_i32, %c0_i32_0 : i32, i32
  }
  func.func @transform_4(%arg0: i32) -> (i32, i32) {
    %c0_i32 = arith.constant 0 : i32
    %c0_i32_0 = arith.constant 0 : i32
    %c0_i32_1 = arith.constant 0 : i32
    return %c0_i32, %c0_i32_0 : i32, i32
  }
  func.func @transform_5(%arg0: i32) -> (i32, i32) {
    %c0_i32 = arith.constant 0 : i32
    %c0_i32_0 = arith.constant 0 : i32
    %c0_i32_1 = arith.constant 0 : i32
    return %c0_i32, %c0_i32_0 : i32, i32
  }
  func.func @transform_6(%arg0: i32) -> (i32, i32) {
    %c0_i32 = arith.constant 0 : i32
    %c0_i32_0 = arith.constant 0 : i32
    %c0_i32_1 = arith.constant 0 : i32
    return %c0_i32, %c0_i32_0 : i32, i32
  }
}

</mosaic_0001>

<llo_original>
// kernel: single_block_pallas.1
$region0: #{single_block_pallas.1}
  #allocation0 [shape = 'u32[]', space=smem, size = 0x4, offset = 0x4, fixed_abs, tag = 'smem constant byte address 0x4 - core index']
  #allocation1 [shape = 'u32[144,128]{1,0:T(1,128)}', space=vmem, size = 0x12000, scoped, tag = 'internal scratch']
  #allocation2 [shape = 'f32[8,1024]{1,0:T(8,128)}', space=vmem, size = 0x8000, scoped, tag = 'scratch operand']
  #allocation3 [shape = 'f32[72,512]{1,0:T(8,128)}', space=vmem, size = 0x24000, scoped, tag = 'scratch operand']
  %s0 = inlined_call_operand.vmem [shape: f32[36,512], index: 0, kind: input, shape index: {}]
  %s1 = inlined_call_operand.vmem [shape: f32[8,512], index: 1, kind: input, shape index: {}]
  %s2 = inlined_call_operand.vmem [shape: f32[9,512], index: 2, kind: input, shape index: {}]
  %s3 = inlined_call_operand.vmem [shape: f32[8,36], index: 3, kind: input, shape index: {}]
  %s4 = inlined_call_operand.vmem [shape: f32[8,72], index: 4, kind: input, shape index: {}]
  %s5 = inlined_call_operand.vmem [shape: f32[8,4], index: 5, kind: input, shape index: {}]
  %s6 = inlined_call_operand.vmem [shape: f32[8,512], index: 6, kind: output, shape index: {}]
  %s7 = sld [smem:[#allocation0]]
  $region34: #{single_block_pallas.1} parent=0
    _
  %s9 = ssub.s32 1, %s7
  %s10 = scalar_select 0, %s9, %s7
  // Predicated region
  $region2: #{single_block_pallas.1} parent=0 // pred_check
    _
  $region3: #{single_block_pallas.1} parent=0 // pred_check_branch
    %12 = sbr.rel (0) target = $region5
  $region4: #{single_block_pallas.1} parent=0 // pred_region
    _
  $region5: #{single_block_pallas.1} parent=0 // pred_fallthru
    _
  // Predicated region
  $region6: #{single_block_pallas.1} parent=0 // pred_check
    _
  $region7: #{single_block_pallas.1} parent=0 // pred_check_branch
    %14 = sbr.rel (0) target = $region9
  $region8: #{single_block_pallas.1} parent=0 // pred_region
    _
  $region9: #{single_block_pallas.1} parent=0 // pred_fallthru
    _
  // Predicated region
  $region10: #{single_block_pallas.1} parent=0 // pred_check
    _
  $region11: #{single_block_pallas.1} parent=0 // pred_check_branch
    %16 = sbr.rel (0) target = $region13
  $region12: #{single_block_pallas.1} parent=0 // pred_region
    _
  $region13: #{single_block_pallas.1} parent=0 // pred_fallthru
    _
  // Predicated region
  $region14: #{single_block_pallas.1} parent=0 // pred_check
    _
  $region15: #{single_block_pallas.1} parent=0 // pred_check_branch
    %18 = sbr.rel (0) target = $region17
  $region16: #{single_block_pallas.1} parent=0 // pred_region
    _
  $region17: #{single_block_pallas.1} parent=0 // pred_fallthru
    _
  // Predicated region
  $region18: #{single_block_pallas.1} parent=0 // pred_check
    _
  $region19: #{single_block_pallas.1} parent=0 // pred_check_branch
    %20 = sbr.rel (0) target = $region21
  $region20: #{single_block_pallas.1} parent=0 // pred_region
    _
  $region21: #{single_block_pallas.1} parent=0 // pred_fallthru
    _
  // Predicated region
  $region22: #{single_block_pallas.1} parent=0 // pred_check
    _
  $region23: #{single_block_pallas.1} parent=0 // pred_check_branch
    %22 = sbr.rel (0) target = $region25
  $region24: #{single_block_pallas.1} parent=0 // pred_region
    _
  $region25: #{single_block_pallas.1} parent=0 // pred_fallthru
    _
  %v23 = vld [vmem:[%s3] sm:$0xff]
  %v24 = vld [vmem:[%s0] sm:$0xff]
  %v25 = vld [vmem:[%s0 + $0x8] sm:$0xff]
  %v26 = vld [vmem:[%s0 + $0x10] sm:$0xff]
  %v27 = vld [vmem:[%s0 + $0x18] sm:$0xff]
  %v28 = vld [vmem:[%s0 + $0x20] sm:$0xff]
  %v29 = vld [vmem:[%s0 + $0x28] sm:$0xff]
  %v30 = vld [vmem:[%s0 + $0x30] sm:$0xff]
  %v31 = vld [vmem:[%s0 + $0x38] sm:$0xff]
  %v32 = vld [vmem:[%s0 + $0x40] sm:$0xff]
  %v33 = vld [vmem:[%s0 + $0x48] sm:$0xff]
  %v34 = vld [vmem:[%s0 + $0x50] sm:$0xff]
  %v35 = vld [vmem:[%s0 + $0x58] sm:$0xff]
  %v36 = vld [vmem:[%s0 + $0x60] sm:$0xff]
  %v37 = vld [vmem:[%s0 + $0x68] sm:$0xff]
  %v38 = vld [vmem:[%s0 + $0x70] sm:$0xff]
  %v39 = vld [vmem:[%s0 + $0x78] sm:$0xff]
  %v40 = vld [vmem:[%s0 + $0x80] sm:$0xf]
  %v41 = vld [vmem:[%s0 + $0x88] sm:$0xf]
  %v42 = vld [vmem:[%s0 + $0x90] sm:$0xf]
  %v43 = vld [vmem:[%s0 + $0x98] sm:$0xf]
  %vm44 = vcmask 293888
  %v46 = vsel %vm44, %v23, 0
  %vm48 = vcmask 1043456
  %v50 = vsel %vm48, %v40, 0
  %v53 = vsel %vm48, %v41, 0
  %v56 = vsel %vm48, %v42, 0
  %v59 = vsel %vm48, %v43, 0
  %61 = vmatprep.subr.mxu0 0.0
  %62 = vmatpush1.msra.mxu0 0.0
  %63 = vmatprep.subr.mxu0 0.0
  %64 = vmatpush1.msra.mxu0 0.0
  %65 = vmatprep.subr.mxu0 0.0
  %66 = vmatpush1.msra.mxu0 0.0
  %67 = vmatprep.subr.mxu0 0.0
  %68 = vmatpush1.msra.mxu0 0.0
  %69 = vmatprep.subr.mxu0 0.0
  %70 = vmatpush1.msra.mxu0 0.0
  %71 = vmatprep.subr.mxu0 0.0
  %72 = vmatpush1.msra.mxu0 0.0
  %73 = vmatprep.subr.mxu0 0.0
  %74 = vmatpush1.msra.mxu0 0.0
  %75 = vmatprep.subr.mxu0 0.0
  %76 = vmatpush1.msra.mxu0 0.0
  %77 = vmatprep.subr.mxu0 0.0
  %78 = vmatpush1.msra.mxu0 0.0
  %79 = vmatprep.subr.mxu0 0.0
  %80 = vmatpush1.msra.mxu0 0.0
  %81 = vmatprep.subr.mxu0 0.0
  %82 = vmatpush1.msra.mxu0 0.0
  %83 = vmatprep.subr.mxu0 %v53
  %84 = vmatpush1.msra.mxu0 %v50
  %85 = vmatprep.subr.mxu0 %v37
  %86 = vmatpush1.msra.mxu0 %v36
  %87 = vmatprep.subr.mxu0 %v33
  %88 = vmatpush1.msra.mxu0 %v32
  %89 = vmatprep.subr.mxu0 %v29
  %90 = vmatpush1.msra.mxu0 %v28
  %91 = vmatprep.subr.mxu0 %v25
  %92 = vmatpush1.msra.mxu0 %v24
  %93 = vmatprep.subr.mxu0 0.0
  %94 = vmatpush2.msra.mxu0 0.0
  %95 = vmatprep.subr.mxu0 0.0
  %96 = vmatpush2.msra.mxu0 0.0
  %97 = vmatprep.subr.mxu0 0.0
  %98 = vmatpush2.msra.mxu0 0.0
  %99 = vmatprep.subr.mxu0 0.0
  %100 = vmatpush2.msra.mxu0 0.0
  %101 = vmatprep.subr.mxu0 0.0
  %102 = vmatpush2.msra.mxu0 0.0
  %103 = vmatprep.subr.mxu0 0.0
  %104 = vmatpush2.msra.mxu0 0.0
  %105 = vmatprep.subr.mxu0 0.0
  %106 = vmatpush2.msra.mxu0 0.0
  %107 = vmatprep.subr.mxu0 0.0
  %108 = vmatpush2.msra.mxu0 0.0
  %109 = vmatprep.subr.mxu0 0.0
  %110 = vmatpush2.msra.mxu0 0.0
  %111 = vmatprep.subr.mxu0 0.0
  %112 = vmatpush2.msra.mxu0 0.0
  %113 = vmatprep.subr.mxu0 0.0
  %114 = vmatpush2.msra.mxu0 0.0
  %115 = vmatprep.subr.mxu0 0.0
  %116 = vmatpush2.msra.mxu0 0.0
  %117 = vmatprep.subr.mxu0 0.0
  %118 = vmatpush2.msra.mxu0 0.0
  %119 = vmatprep.subr.mxu0 0.0
  %120 = vmatpush2.msra.mxu0 0.0
  %121 = vmatprep.subr.mxu0 0.0
  %122 = vmatpush2.msra.mxu0 0.0
  %123 = vmatprep.subr.mxu0 0.0
  %124 = vmatpush2.msra.mxu0 0.0
  %125 = vmatprep.mubr.f32.mxu0 0.0
  %126 = vmatmul.mubr.f32.gmra.mxu0 %v46
  %v127 = vpop.f32.mrf.mxu0
  %v128 = vadd.f32 0.0, %v127
  %v129 = vpop.f32.mrf.mxu0
  %v130 = vadd.f32 0.0, %v129
  %131 = vdwg.mxu0
  %132 = vmatprep.subr.mxu0 0.0
  %133 = vmatpush1.msra.mxu0 0.0
  %134 = vmatprep.subr.mxu0 0.0
  %135 = vmatpush1.msra.mxu0 0.0
  %136 = vmatprep.subr.mxu0 0.0
  %137 = vmatpush1.msra.mxu0 0.0
  %138 = vmatprep.subr.mxu0 0.0
  %139 = vmatpush1.msra.mxu0 0.0
  %140 = vmatprep.subr.mxu0 0.0
  %141 = vmatpush1.msra.mxu0 0.0
  %142 = vmatprep.subr.mxu0 0.0
  %143 = vmatpush1.msra.mxu0 0.0
  %144 = vmatprep.subr.mxu0 0.0
  %145 = vmatpush1.msra.mxu0 0.0
  %146 = vmatprep.subr.mxu0 0.0
  %147 = vmatpush1.msra.mxu0 0.0
  %148 = vmatprep.subr.mxu0 0.0
  %149 = vmatpush1.msra.mxu0 0.0
  %150 = vmatprep.subr.mxu0 0.0
  %151 = vmatpush1.msra.mxu0 0.0
  %152 = vmatprep.subr.mxu0 0.0
  %153 = vmatpush1.msra.mxu0 0.0
  %154 = vmatprep.subr.mxu0 %v59
  %155 = vmatpush1.msra.mxu0 %v56
  %156 = vmatprep.subr.mxu0 %v39
  %157 = vmatpush1.msra.mxu0 %v38
  %158 = vmatprep.subr.mxu0 %v35
  %159 = vmatpush1.msra.mxu0 %v34
  %160 = vmatprep.subr.mxu0 %v31
  %161 = vmatpush1.msra.mxu0 %v30
  %162 = vmatprep.subr.mxu0 %v27
  %163 = vmatpush1.msra.mxu0 %v26
  %164 = vmatprep.subr.mxu0 0.0
  %165 = vmatpush2.msra.mxu0 0.0
  %166 = vmatprep.subr.mxu0 0.0
  %167 = vmatpush2.msra.mxu0 0.0
  %168 = vmatprep.subr.mxu0 0.0
  %169 = vmatpush2.msra.mxu0 0.0
  %170 = vmatprep.subr.mxu0 0.0
  %171 = vmatpush2.msra.mxu0 0.0
  %172 = vmatprep.subr.mxu0 0.0
  %173 = vmatpush2.msra.mxu0 0.0
  %174 = vmatprep.subr.mxu0 0.0
  %175 = vmatpush2.msra.mxu0 0.0
  %176 = vmatprep.subr.mxu0 0.0
  %177 = vmatpush2.msra.mxu0 0.0
  %178 = vmatprep.subr.mxu0 0.0
  %179 = vmatpush2.msra.mxu0 0.0
  %180 = vmatprep.subr.mxu0 0.0
  %181 = vmatpush2.msra.mxu0 0.0
  %182 = vmatprep.subr.mxu0 0.0
  %183 = vmatpush2.msra.mxu0 0.0
  %184 = vmatprep.subr.mxu0 0.0
  %185 = vmatpush2.msra.mxu0 0.0
  %186 = vmatprep.subr.mxu0 0.0
  %187 = vmatpush2.msra.mxu0 0.0
  %188 = vmatprep.subr.mxu0 0.0
  %189 = vmatpush2.msra.mxu0 0.0
  %190 = vmatprep.subr.mxu0 0.0
  %191 = vmatpush2.msra.mxu0 0.0
  %192 = vmatprep.subr.mxu0 0.0
  %193 = vmatpush2.msra.mxu0 0.0
  %194 = vmatprep.subr.mxu0 0.0
  %195 = vmatpush2.msra.mxu0 0.0
  %196 = vmatprep.mubr.f32.mxu0 0.0
  %197 = vmatmul.mubr.f32.gmra.mxu0 %v46
  %v198 = vpop.f32.mrf.mxu0
  %v199 = vadd.f32 0.0, %v198
  %v200 = vpop.f32.mrf.mxu0
  %v201 = vadd.f32 0.0, %v200
  %202 = vdwg.mxu0
  %v203 = vld [vmem:[%s5] sm:$0xff]
  %v204 = vadd.f32 %v128, %v130
  %v205 = vadd.f32 %v204, %v199
  %v206 = vadd.f32 %v205, %v201
  %207 = vadd.xlane.f32.xlu0 %v206
  %v208 = vpop.xlane.xlu0 %207
  %v209 = vrcp.pop 512.0
  %v210 = vmul.f32 %v208, %v209
  %v211 = vsub.f32 %v128, %v210
  %v212 = vsub.f32 %v130, %v210
  %v213 = vsub.f32 %v199, %v210
  %v214 = vsub.f32 %v201, %v210
  %v215 = vmul.f32 %v211, %v211
  %v216 = vmul.f32 %v212, %v212
  %v217 = vmul.f32 %v213, %v213
  %v218 = vmul.f32 %v214, %v214
  %v219 = vadd.f32 %v215, %v216
  %v220 = vadd.f32 %v219, %v217
  %v221 = vadd.f32 %v220, %v218
  %222 = vadd.xlane.f32.xlu0 %v221
  %v223 = vpop.xlane.xlu0 %222
  %v224 = vmul.f32 %v223, %v209
  %v225 = vadd.f32 %v224, 1e-05
  %v226 = vrsqrt.pop %v225
  %v227 = vmul.f32 %v226, %v203
  %229 = vset.pattern.permute.xlu0 0
  %230 = vperm.xlu0 %229, %v227
  %v231 = vpop.permute.xlu0 %230
  %v233 = vmul.f32 %v211, %v231
  %v234 = vmul.f32 %v212, %v231
  %v235 = vmul.f32 %v213, %v231
  %v236 = vmul.f32 %v214, %v231
  %238 = vset.pattern.permute.xlu0 1
  %239 = vperm.xlu0 %238, %v203
  %v240 = vpop.permute.xlu0 %239
  %v242 = vadd.f32 %v233, %v240
  %v243 = vadd.f32 %v234, %v240
  %v244 = vadd.f32 %v235, %v240
  %v245 = vadd.f32 %v236, %v240
  %vm246 = vcmp.gt.f32.partialorder %v242, 0.0
  %vm247 = vcmp.gt.f32.partialorder %v243, 0.0
  %vm248 = vcmp.gt.f32.partialorder %v244, 0.0
  %vm249 = vcmp.gt.f32.partialorder %v245, 0.0
  %v250 = vmul.f32 %v242, 0.01
  %v251 = vmul.f32 %v243, 0.01
  %v252 = vmul.f32 %v244, 0.01
  %v253 = vmul.f32 %v245, 0.01
  %v254 = vsel %vm246, %v242, %v250
  %v255 = vsel %vm247, %v243, %v251
  %v256 = vsel %vm248, %v244, %v252
  %v257 = vsel %vm249, %v245, %v253
  %258 = vst [vmem:[#allocation2] sm:$0xff] %v254
  %259 = vst [vmem:[#allocation2 + $0x8] sm:$0xff] %v255
  %260 = vst [vmem:[#allocation2 + $0x10] sm:$0xff] %v256
  %261 = vst [vmem:[#allocation2 + $0x18] sm:$0xff] %v257
  %262 = vst [vmem:[#allocation2 + $0x20] sm:$0xff] %v254
  %263 = vst [vmem:[#allocation2 + $0x28] sm:$0xff] %v255
  %264 = vst [vmem:[#allocation2 + $0x30] sm:$0xff] %v256
  %265 = vst [vmem:[#allocation2 + $0x38] sm:$0xff] %v257
  %v266 = vld [vmem:[#allocation2 + $0x18] sm:$0xff]
  %v267 = vld [vmem:[#allocation2 + $0x20] sm:$0xff]
  %v268 = vld [vmem:[#allocation2 + $0x28] sm:$0xff]
  %v269 = vld [vmem:[#allocation2 + $0x30] sm:$0xff]
  %v270 = vld [vmem:[#allocation2 + $0x38] sm:$0xff]
  %v271 = vld [vmem:[%s2] ss:$8 sm:$0xf]
  %v273 = vlaneseq
  %v274 = vshrl.u32 %v273, 7
  %v275 = vsub.s32 0, %v274
  %v276 = vrot.slane %v271, %v275
  %v277 = vlaneseq
  %v278 = vshrl.u32 %v277, 7
  %v279 = vsub.s32 1, %v278
  %v280 = vrot.slane %v271, %v279
  %v281 = vlaneseq
  %v282 = vshrl.u32 %v281, 7
  %v283 = vsub.s32 2, %v282
  %v284 = vrot.slane %v271, %v283
  %v285 = vlaneseq
  %v286 = vshrl.u32 %v285, 7
  %v287 = vsub.s32 3, %v286
  %v288 = vrot.slane %v271, %v287
  %289 = vrot.lane.b32.xlu0 %v276, 111
  %v290 = vpop.permute.xlu0 %289
  %291 = vrot.lane.b32.xlu0 %v280, 111
  %v292 = vpop.permute.xlu0 %291
  %293 = vrot.lane.b32.xlu0 %v284, 111
  %v294 = vpop.permute.xlu0 %293
  %295 = vrot.lane.b32.xlu0 %v288, 111
  %v296 = vpop.permute.xlu0 %295
  %vm297 = vcmask 908288
  %v298 = vsel %vm297, %v290, %v292
  %v299 = vsel %vm297, %v292, %v294
  %v300 = vsel %vm297, %v294, %v296
  %v306 = vmul.f32 %v266, %v290
  %v307 = vmul.f32 %v267, %v298
  %v308 = vmul.f32 %v268, %v299
  %v309 = vmul.f32 %v269, %v300
  %v310 = vmul.f32 %v270, %v296
  %316 = vrot.lane.b32.xlu0 %v306, 17
  %v317 = vpop.permute.xlu0 %316
  %318 = vrot.lane.b32.xlu0 %v307, 17
  %v319 = vpop.permute.xlu0 %318
  %320 = vrot.lane.b32.xlu0 %v308, 17
  %v321 = vpop.permute.xlu0 %320
  %322 = vrot.lane.b32.xlu0 %v309, 17
  %v323 = vpop.permute.xlu0 %322
  %324 = vrot.lane.b32.xlu0 %v310, 17
  %v325 = vpop.permute.xlu0 %324
  %vm326 = vcmask 138240
  %v327 = vsel %vm326, %v317, %v319
  %v328 = vsel %vm326, %v319, %v321
  %v329 = vsel %vm326, %v321, %v323
  %v330 = vsel %vm326, %v323, %v325
  %335 = vst [vmem:[#allocation3] sm:$0xff] %v327
  %336 = vst [vmem:[#allocation3 + $0x8] sm:$0xff] %v328
  %337 = vst [vmem:[#allocation3 + $0x10] sm:$0xff] %v329
  %338 = vst [vmem:[#allocation3 + $0x18] sm:$0xff] %v330
  %v339 = vld [vmem:[#allocation2 + $0x18] sm:$0xff]
  %v340 = vld [vmem:[#allocation2 + $0x20] sm:$0xff]
  %v341 = vld [vmem:[#allocation2 + $0x28] sm:$0xff]
  %v342 = vld [vmem:[#allocation2 + $0x30] sm:$0xff]
  %v343 = vld [vmem:[#allocation2 + $0x38] sm:$0xff]
  %s344 = scalar_lea.vmem %s2, 1
  %v345 = vld [vmem:[%s344] ss:$8 sm:$0xf]
  %v347 = vlaneseq
  %v348 = vshrl.u32 %v347, 7
  %v349 = vsub.s32 0, %v348
  %v350 = vrot.slane %v345, %v349
  %v351 = vlaneseq
  %v352 = vshrl.u32 %v351, 7
  %v353 = vsub.s32 1, %v352
  %v354 = vrot.slane %v345, %v353
  %v355 = vlaneseq
  %v356 = vshrl.u32 %v355, 7
  %v357 = vsub.s32 2, %v356
  %v358 = vrot.slane %v345, %v357
  %v359 = vlaneseq
  %v360 = vshrl.u32 %v359, 7
  %v361 = vsub.s32 3, %v360
  %v362 = vrot.slane %v345, %v361
  %363 = vrot.lane.b32.xlu0 %v350, 112
  %v364 = vpop.permute.xlu0 %363
  %365 = vrot.lane.b32.xlu0 %v354, 112
  %v366 = vpop.permute.xlu0 %365
  %367 = vrot.lane.b32.xlu0 %v358, 112
  %v368 = vpop.permute.xlu0 %367
  %369 = vrot.lane.b32.xlu0 %v362, 112
  %v370 = vpop.permute.xlu0 %369
  %vm371 = vcmask 916480
  %v372 = vsel %vm371, %v364, %v366
  %v373 = vsel %vm371, %v366, %v368
  %v374 = vsel %vm371, %v368, %v370
  %v380 = vmul.f32 %v339, %v364
  %v381 = vmul.f32 %v340, %v372
  %v382 = vmul.f32 %v341, %v373
  %v383 = vmul.f32 %v342, %v374
  %v384 = vmul.f32 %v343, %v370
  %390 = vrot.lane.b32.xlu0 %v380, 16
  %v391 = vpop.permute.xlu0 %390
  %392 = vrot.lane.b32.xlu0 %v381, 16
  %v393 = vpop.permute.xlu0 %392
  %394 = vrot.lane.b32.xlu0 %v382, 16
  %v395 = vpop.permute.xlu0 %394
  %396 = vrot.lane.b32.xlu0 %v383, 16
  %v397 = vpop.permute.xlu0 %396
  %398 = vrot.lane.b32.xlu0 %v384, 16
  %v399 = vpop.permute.xlu0 %398
  %vm400 = vcmask 130048
  %v401 = vsel %vm400, %v391, %v393
  %v402 = vsel %vm400, %v393, %v395
  %v403 = vsel %vm400, %v395, %v397
  %v404 = vsel %vm400, %v397, %v399
  %409 = vst [vmem:[#allocation3 + $0x20] sm:$0xff] %v401
  %410 = vst [vmem:[#allocation3 + $0x28] sm:$0xff] %v402
  %411 = vst [vmem:[#allocation3 + $0x30] sm:$0xff] %v403
  %412 = vst [vmem:[#allocation3 + $0x38] sm:$0xff] %v404
  %v413 = vld [vmem:[#allocation2 + $0x18] sm:$0xff]
  %v414 = vld [vmem:[#allocation2 + $0x20] sm:$0xff]
  %v415 = vld [vmem:[#allocation2 + $0x28] sm:$0xff]
  %v416 = vld [vmem:[#allocation2 + $0x30] sm:$0xff]
  %v417 = vld [vmem:[#allocation2 + $0x38] sm:$0xff]
  %s418 = scalar_lea.vmem %s2, 2
  %v419 = vld [vmem:[%s418] ss:$8 sm:$0xf]
  %v421 = vlaneseq
  %v422 = vshrl.u32 %v421, 7
  %v423 = vsub.s32 0, %v422
  %v424 = vrot.slane %v419, %v423
  %v425 = vlaneseq
  %v426 = vshrl.u32 %v425, 7
  %v427 = vsub.s32 1, %v426
  %v428 = vrot.slane %v419, %v427
  %v429 = vlaneseq
  %v430 = vshrl.u32 %v429, 7
  %v431 = vsub.s32 2, %v430
  %v432 = vrot.slane %v419, %v431
  %v433 = vlaneseq
  %v434 = vshrl.u32 %v433, 7
  %v435 = vsub.s32 3, %v434
  %v436 = vrot.slane %v419, %v435
  %437 = vrot.lane.b32.xlu0 %v424, 113
  %v438 = vpop.permute.xlu0 %437
  %439 = vrot.lane.b32.xlu0 %v428, 113
  %v440 = vpop.permute.xlu0 %439
  %441 = vrot.lane.b32.xlu0 %v432, 113
  %v442 = vpop.permute.xlu0 %441
  %443 = vrot.lane.b32.xlu0 %v436, 113
  %v444 = vpop.permute.xlu0 %443
  %vm445 = vcmask 924672
  %v446 = vsel %vm445, %v438, %v440
  %v447 = vsel %vm445, %v440, %v442
  %v448 = vsel %vm445, %v442, %v444
  %v454 = vmul.f32 %v413, %v438
  %v455 = vmul.f32 %v414, %v446
  %v456 = vmul.f32 %v415, %v447
  %v457 = vmul.f32 %v416, %v448
  %v458 = vmul.f32 %v417, %v444
  %464 = vrot.lane.b32.xlu0 %v454, 15
  %v465 = vpop.permute.xlu0 %464
  %466 = vrot.lane.b32.xlu0 %v455, 15
  %v467 = vpop.permute.xlu0 %466
  %468 = vrot.lane.b32.xlu0 %v456, 15
  %v469 = vpop.permute.xlu0 %468
  %470 = vrot.lane.b32.xlu0 %v457, 15
  %v471 = vpop.permute.xlu0 %470
  %472 = vrot.lane.b32.xlu0 %v458, 15
  %v473 = vpop.permute.xlu0 %472
  %vm474 = vcmask 121856
  %v475 = vsel %vm474, %v465, %v467
  %v476 = vsel %vm474, %v467, %v469
  %v477 = vsel %vm474, %v469, %v471
  %v478 = vsel %vm474, %v471, %v473
  %483 = vst [vmem:[#allocation3 + $0x40] sm:$0xff] %v475
  %484 = vst [vmem:[#allocation3 + $0x48] sm:$0xff] %v476
  %485 = vst [vmem:[#allocation3 + $0x50] sm:$0xff] %v477
  %486 = vst [vmem:[#allocation3 + $0x58] sm:$0xff] %v478
  %v487 = vld [vmem:[#allocation2 + $0x18] sm:$0xff]
  %v488 = vld [vmem:[#allocation2 + $0x20] sm:$0xff]
  %v489 = vld [vmem:[#allocation2 + $0x28] sm:$0xff]
  %v490 = vld [vmem:[#allocation2 + $0x30] sm:$0xff]
  %v491 = vld [vmem:[#allocation2 + $0x38] sm:$0xff]
  %s492 = scalar_lea.vmem %s2, 3
  %v493 = vld [vmem:[%s492] ss:$8 sm:$0xf]
  %v495 = vlaneseq
  %v496 = vshrl.u32 %v495, 7
  %v497 = vsub.s32 0, %v496
  %v498 = vrot.slane %v493, %v497
  %v499 = vlaneseq
  %v500 = vshrl.u32 %v499, 7
  %v501 = vsub.s32 1, %v500
  %v502 = vrot.slane %v493, %v501
  %v503 = vlaneseq
  %v504 = vshrl.u32 %v503, 7
  %v505 = vsub.s32 2, %v504
  %v506 = vrot.slane %v493, %v505
  %v507 = vlaneseq
  %v508 = vshrl.u32 %v507, 7
  %v509 = vsub.s32 3, %v508
  %v510 = vrot.slane %v493, %v509
  %511 = vrot.lane.b32.xlu0 %v498, 127
  %v512 = vpop.permute.xlu0 %511
  %513 = vrot.lane.b32.xlu0 %v502, 127
  %v514 = vpop.permute.xlu0 %513
  %515 = vrot.lane.b32.xlu0 %v506, 127
  %v516 = vpop.permute.xlu0 %515
  %517 = vrot.lane.b32.xlu0 %v510, 127
  %v518 = vpop.permute.xlu0 %517
  %vm519 = vcmask 1039360
  %v520 = vsel %vm519, %v512, %v514
  %v521 = vsel %vm519, %v514, %v516
  %v522 = vsel %vm519, %v516, %v518
  %v528 = vmul.f32 %v487, %v512
  %v529 = vmul.f32 %v488, %v520
  %v530 = vmul.f32 %v489, %v521
  %v531 = vmul.f32 %v490, %v522
  %v532 = vmul.f32 %v491, %v518
  %538 = vrot.lane.b32.xlu0 %v528, 1
  %v539 = vpop.permute.xlu0 %538
  %540 = vrot.lane.b32.xlu0 %v529, 1
  %v541 = vpop.permute.xlu0 %540
  %542 = vrot.lane.b32.xlu0 %v530, 1
  %v543 = vpop.permute.xlu0 %542
  %544 = vrot.lane.b32.xlu0 %v531, 1
  %v545 = vpop.permute.xlu0 %544
  %546 = vrot.lane.b32.xlu0 %v532, 1
  %v547 = vpop.permute.xlu0 %546
  %vm548 = vcmask 7168
  %v549 = vsel %vm548, %v539, %v541
  %v550 = vsel %vm548, %v541, %v543
  %v551 = vsel %vm548, %v543, %v545
  %v552 = vsel %vm548, %v545, %v547
  %557 = vst [vmem:[#allocation3 + $0x60] sm:$0xff] %v549
  %558 = vst [vmem:[#allocation3 + $0x68] sm:$0xff] %v550
  %559 = vst [vmem:[#allocation3 + $0x70] sm:$0xff] %v551
  %560 = vst [vmem:[#allocation3 + $0x78] sm:$0xff] %v552
  %561 = vst [vmem:[#allocation3 + $0x80] sm:$0xff] %v254
  %562 = vst [vmem:[#allocation3 + $0x88] sm:$0xff] %v255
  %563 = vst [vmem:[#allocation3 + $0x90] sm:$0xff] %v256
  %564 = vst [vmem:[#allocation3 + $0x98] sm:$0xff] %v257
  %v565 = vld [vmem:[#allocation2] sm:$0xff]
  %v566 = vld [vmem:[#allocation2 + $0x8] sm:$0xff]
  %v567 = vld [vmem:[#allocation2 + $0x10] sm:$0xff]
  %v568 = vld [vmem:[#allocation2 + $0x18] sm:$0xff]
  %v569 = vld [vmem:[#allocation2 + $0x20] sm:$0xff]
  %s570 = scalar_lea.vmem %s2, 5
  %v571 = vld [vmem:[%s570] ss:$8 sm:$0xf]
  %v573 = vlaneseq
  %v574 = vshrl.u32 %v573, 7
  %v575 = vsub.s32 0, %v574
  %v576 = vrot.slane %v571, %v575
  %v577 = vlaneseq
  %v578 = vshrl.u32 %v577, 7
  %v579 = vsub.s32 1, %v578
  %v580 = vrot.slane %v571, %v579
  %v581 = vlaneseq
  %v582 = vshrl.u32 %v581, 7
  %v583 = vsub.s32 2, %v582
  %v584 = vrot.slane %v571, %v583
  %v585 = vlaneseq
  %v586 = vshrl.u32 %v585, 7
  %v587 = vsub.s32 3, %v586
  %v588 = vrot.slane %v571, %v587
  %589 = vrot.lane.b32.xlu0 %v576, 1
  %v590 = vpop.permute.xlu0 %589
  %591 = vrot.lane.b32.xlu0 %v580, 1
  %v592 = vpop.permute.xlu0 %591
  %593 = vrot.lane.b32.xlu0 %v584, 1
  %v594 = vpop.permute.xlu0 %593
  %595 = vrot.lane.b32.xlu0 %v588, 1
  %v596 = vpop.permute.xlu0 %595
  %v597 = vsel %vm548, %v590, %v592
  %v598 = vsel %vm548, %v592, %v594
  %v599 = vsel %vm548, %v594, %v596
  %v605 = vmul.f32 %v565, %v590
  %v606 = vmul.f32 %v566, %v597
  %v607 = vmul.f32 %v567, %v598
  %v608 = vmul.f32 %v568, %v599
  %v609 = vmul.f32 %v569, %v596
  %615 = vrot.lane.b32.xlu0 %v605, 127
  %v616 = vpop.permute.xlu0 %615
  %617 = vrot.lane.b32.xlu0 %v606, 127
  %v618 = vpop.permute.xlu0 %617
  %619 = vrot.lane.b32.xlu0 %v607, 127
  %v620 = vpop.permute.xlu0 %619
  %621 = vrot.lane.b32.xlu0 %v608, 127
  %v622 = vpop.permute.xlu0 %621
  %623 = vrot.lane.b32.xlu0 %v609, 127
  %v624 = vpop.permute.xlu0 %623
  %v625 = vsel %vm519, %v616, %v618
  %v626 = vsel %vm519, %v618, %v620
  %v627 = vsel %vm519, %v620, %v622
  %v628 = vsel %vm519, %v622, %v624
  %633 = vst [vmem:[#allocation3 + $0xa0] sm:$0xff] %v625
  %634 = vst [vmem:[#allocation3 + $0xa8] sm:$0xff] %v626
  %635 = vst [vmem:[#allocation3 + $0xb0] sm:$0xff] %v627
  %636 = vst [vmem:[#allocation3 + $0xb8] sm:$0xff] %v628
  %v637 = vld [vmem:[#allocation2] sm:$0xff]
  %v638 = vld [vmem:[#allocation2 + $0x8] sm:$0xff]
  %v639 = vld [vmem:[#allocation2 + $0x10] sm:$0xff]
  %v640 = vld [vmem:[#allocation2 + $0x18] sm:$0xff]
  %v641 = vld [vmem:[#allocation2 + $0x20] sm:$0xff]
  %s642 = scalar_lea.vmem %s2, 6
  %v643 = vld [vmem:[%s642] ss:$8 sm:$0xf]
  %v645 = vlaneseq
  %v646 = vshrl.u32 %v645, 7
  %v647 = vsub.s32 0, %v646
  %v648 = vrot.slane %v643, %v647
  %v649 = vlaneseq
  %v650 = vshrl.u32 %v649, 7
  %v651 = vsub.s32 1, %v650
  %v652 = vrot.slane %v643, %v651
  %v653 = vlaneseq
  %v654 = vshrl.u32 %v653, 7
  %v655 = vsub.s32 2, %v654
  %v656 = vrot.slane %v643, %v655
  %v657 = vlaneseq
  %v658 = vshrl.u32 %v657, 7
  %v659 = vsub.s32 3, %v658
  %v660 = vrot.slane %v643, %v659
  %661 = vrot.lane.b32.xlu0 %v648, 15
  %v662 = vpop.permute.xlu0 %661
  %663 = vrot.lane.b32.xlu0 %v652, 15
  %v664 = vpop.permute.xlu0 %663
  %665 = vrot.lane.b32.xlu0 %v656, 15
  %v666 = vpop.permute.xlu0 %665
  %667 = vrot.lane.b32.xlu0 %v660, 15
  %v668 = vpop.permute.xlu0 %667
  %v669 = vsel %vm474, %v662, %v664
  %v670 = vsel %vm474, %v664, %v666
  %v671 = vsel %vm474, %v666, %v668
  %v677 = vmul.f32 %v637, %v662
  %v678 = vmul.f32 %v638, %v669
  %v679 = vmul.f32 %v639, %v670
  %v680 = vmul.f32 %v640, %v671
  %v681 = vmul.f32 %v641, %v668
  %687 = vrot.lane.b32.xlu0 %v677, 113
  %v688 = vpop.permute.xlu0 %687
  %689 = vrot.lane.b32.xlu0 %v678, 113
  %v690 = vpop.permute.xlu0 %689
  %691 = vrot.lane.b32.xlu0 %v679, 113
  %v692 = vpop.permute.xlu0 %691
  %693 = vrot.lane.b32.xlu0 %v680, 113
  %v694 = vpop.permute.xlu0 %693
  %695 = vrot.lane.b32.xlu0 %v681, 113
  %v696 = vpop.permute.xlu0 %695
  %v697 = vsel %vm445, %v688, %v690
  %v698 = vsel %vm445, %v690, %v692
  %v699 = vsel %vm445, %v692, %v694
  %v700 = vsel %vm445, %v694, %v696
  %705 = vst [vmem:[#allocation3 + $0xc0] sm:$0xff] %v697
  %706 = vst [vmem:[#allocation3 + $0xc8] sm:$0xff] %v698
  %707 = vst [vmem:[#allocation3 + $0xd0] sm:$0xff] %v699
  %708 = vst [vmem:[#allocation3 + $0xd8] sm:$0xff] %v700
  %v709 = vld [vmem:[#allocation2] sm:$0xff]
  %v710 = vld [vmem:[#allocation2 + $0x8] sm:$0xff]
  %v711 = vld [vmem:[#allocation2 + $0x10] sm:$0xff]
  %v712 = vld [vmem:[#allocation2 + $0x18] sm:$0xff]
  %v713 = vld [vmem:[#allocation2 + $0x20] sm:$0xff]
  %s714 = scalar_lea.vmem %s2, 7
  %v715 = vld [vmem:[%s714] ss:$8 sm:$0xf]
  %v717 = vlaneseq
  %v718 = vshrl.u32 %v717, 7
  %v719 = vsub.s32 0, %v718
  %v720 = vrot.slane %v715, %v719
  %v721 = vlaneseq
  %v722 = vshrl.u32 %v721, 7
  %v723 = vsub.s32 1, %v722
  %v724 = vrot.slane %v715, %v723
  %v725 = vlaneseq
  %v726 = vshrl.u32 %v725, 7
  %v727 = vsub.s32 2, %v726
  %v728 = vrot.slane %v715, %v727
  %v729 = vlaneseq
  %v730 = vshrl.u32 %v729, 7
  %v731 = vsub.s32 3, %v730
  %v732 = vrot.slane %v715, %v731
  %733 = vrot.lane.b32.xlu0 %v720, 16
  %v734 = vpop.permute.xlu0 %733
  %735 = vrot.lane.b32.xlu0 %v724, 16
  %v736 = vpop.permute.xlu0 %735
  %737 = vrot.lane.b32.xlu0 %v728, 16
  %v738 = vpop.permute.xlu0 %737
  %739 = vrot.lane.b32.xlu0 %v732, 16
  %v740 = vpop.permute.xlu0 %739
  %v741 = vsel %vm400, %v734, %v736
  %v742 = vsel %vm400, %v736, %v738
  %v743 = vsel %vm400, %v738, %v740
  %v749 = vmul.f32 %v709, %v734
  %v750 = vmul.f32 %v710, %v741
  %v751 = vmul.f32 %v711, %v742
  %v752 = vmul.f32 %v712, %v743
  %v753 = vmul.f32 %v713, %v740
  %759 = vrot.lane.b32.xlu0 %v749, 112
  %v760 = vpop.permute.xlu0 %759
  %761 = vrot.lane.b32.xlu0 %v750, 112
  %v762 = vpop.permute.xlu0 %761
  %763 = vrot.lane.b32.xlu0 %v751, 112
  %v764 = vpop.permute.xlu0 %763
  %765 = vrot.lane.b32.xlu0 %v752, 112
  %v766 = vpop.permute.xlu0 %765
  %767 = vrot.lane.b32.xlu0 %v753, 112
  %v768 = vpop.permute.xlu0 %767
  %v769 = vsel %vm371, %v760, %v762
  %v770 = vsel %vm371, %v762, %v764
  %v771 = vsel %vm371, %v764, %v766
  %v772 = vsel %vm371, %v766, %v768
  %777 = vst [vmem:[#allocation3 + $0xe0] sm:$0xff] %v769
  %778 = vst [vmem:[#allocation3 + $0xe8] sm:$0xff] %v770
  %779 = vst [vmem:[#allocation3 + $0xf0] sm:$0xff] %v771
  %780 = vst [vmem:[#allocation3 + $0xf8] sm:$0xff] %v772
  %v781 = vld [vmem:[#allocation2] sm:$0xff]
  %v782 = vld [vmem:[#allocation2 + $0x8] sm:$0xff]
  %v783 = vld [vmem:[#allocation2 + $0x10] sm:$0xff]
  %v784 = vld [vmem:[#allocation2 + $0x18] sm:$0xff]
  %v785 = vld [vmem:[#allocation2 + $0x20] sm:$0xff]
  %s786 = scalar_lea.vmem %s2, 32
  %v787 = vld [vmem:[%s786] ss:$8 sm:$0xf]
  %v789 = vlaneseq
  %v790 = vshrl.u32 %v789, 7
  %v791 = vsub.s32 0, %v790
  %v792 = vrot.slane %v787, %v791
  %v793 = vlaneseq
  %v794 = vshrl.u32 %v793, 7
  %v795 = vsub.s32 1, %v794
  %v796 = vrot.slane %v787, %v795
  %v797 = vlaneseq
  %v798 = vshrl.u32 %v797, 7
  %v799 = vsub.s32 2, %v798
  %v800 = vrot.slane %v787, %v799
  %v801 = vlaneseq
  %v802 = vshrl.u32 %v801, 7
  %v803 = vsub.s32 3, %v802
  %v804 = vrot.slane %v787, %v803
  %805 = vrot.lane.b32.xlu0 %v792, 17
  %v806 = vpop.permute.xlu0 %805
  %807 = vrot.lane.b32.xlu0 %v796, 17
  %v808 = vpop.permute.xlu0 %807
  %809 = vrot.lane.b32.xlu0 %v800, 17
  %v810 = vpop.permute.xlu0 %809
  %811 = vrot.lane.b32.xlu0 %v804, 17
  %v812 = vpop.permute.xlu0 %811
  %v813 = vsel %vm326, %v806, %v808
  %v814 = vsel %vm326, %v808, %v810
  %v815 = vsel %vm326, %v810, %v812
  %v821 = vmul.f32 %v781, %v806
  %v822 = vmul.f32 %v782, %v813
  %v823 = vmul.f32 %v783, %v814
  %v824 = vmul.f32 %v784, %v815
  %v825 = vmul.f32 %v785, %v812
  %831 = vrot.lane.b32.xlu0 %v821, 111
  %v832 = vpop.permute.xlu0 %831
  %833 = vrot.lane.b32.xlu0 %v822, 111
  %v834 = vpop.permute.xlu0 %833
  %835 = vrot.lane.b32.xlu0 %v823, 111
  %v836 = vpop.permute.xlu0 %835
  %837 = vrot.lane.b32.xlu0 %v824, 111
  %v838 = vpop.permute.xlu0 %837
  %839 = vrot.lane.b32.xlu0 %v825, 111
  %v840 = vpop.permute.xlu0 %839
  %v841 = vsel %vm297, %v832, %v834
  %v842 = vsel %vm297, %v834, %v836
  %v843 = vsel %vm297, %v836, %v838
  %v844 = vsel %vm297, %v838, %v840
  %849 = vst [vmem:[#allocation3 + $0x100] sm:$0xff] %v841
  %850 = vst [vmem:[#allocation3 + $0x108] sm:$0xff] %v842
  %851 = vst [vmem:[#allocation3 + $0x110] sm:$0xff] %v843
  %852 = vst [vmem:[#allocation3 + $0x118] sm:$0xff] %v844
  %v853 = vld [vmem:[%s4] sm:$0xff]
  %v854 = vld [vmem:[#allocation3] sm:$0xff]
  %v855 = vld [vmem:[#allocation3 + $0x8] sm:$0xff]
  %v856 = vld [vmem:[#allocation3 + $0x10] sm:$0xff]
  %v857 = vld [vmem:[#allocation3 + $0x18] sm:$0xff]
  %v858 = vld [vmem:[#allocation3 + $0x20] sm:$0xff]
  %v859 = vld [vmem:[#allocation3 + $0x28] sm:$0xff]
  %v860 = vld [vmem:[#allocation3 + $0x30] sm:$0xff]
  %v861 = vld [vmem:[#allocation3 + $0x38] sm:$0xff]
  %v862 = vld [vmem:[#allocation3 + $0x40] sm:$0xff]
  %v863 = vld [vmem:[#allocation3 + $0x48] sm:$0xff]
  %v864 = vld [vmem:[#allocation3 + $0x50] sm:$0xff]
  %v865 = vld [vmem:[#allocation3 + $0x58] sm:$0xff]
  %v866 = vld [vmem:[#allocation3 + $0x60] sm:$0xff]
  %v867 = vld [vmem:[#allocation3 + $0x68] sm:$0xff]
  %v868 = vld [vmem:[#allocation3 + $0x70] sm:$0xff]
  %v869 = vld [vmem:[#allocation3 + $0x78] sm:$0xff]
  %v870 = vld [vmem:[#allocation3 + $0x80] sm:$0xff]
  %v871 = vld [vmem:[#allocation3 + $0x88] sm:$0xff]
  %v872 = vld [vmem:[#allocation3 + $0x90] sm:$0xff]
  %v873 = vld [vmem:[#allocation3 + $0x98] sm:$0xff]
  %v874 = vld [vmem:[#allocation3 + $0xa0] sm:$0xff]
  %v875 = vld [vmem:[#allocation3 + $0xa8] sm:$0xff]
  %v876 = vld [vmem:[#allocation3 + $0xb0] sm:$0xff]
  %v877 = vld [vmem:[#allocation3 + $0xb8] sm:$0xff]
  %v878 = vld [vmem:[#allocation3 + $0xc0] sm:$0xff]
  %v879 = vld [vmem:[#allocation3 + $0xc8] sm:$0xff]
  %v880 = vld [vmem:[#allocation3 + $0xd0] sm:$0xff]
  %v881 = vld [vmem:[#allocation3 + $0xd8] sm:$0xff]
  %v882 = vld [vmem:[#allocation3 + $0xe0] sm:$0xff]
  %v883 = vld [vmem:[#allocation3 + $0xe8] sm:$0xff]
  %v884 = vld [vmem:[#allocation3 + $0xf0] sm:$0xff]
  %v885 = vld [vmem:[#allocation3 + $0xf8] sm:$0xff]
  %v886 = vld [vmem:[#allocation3 + $0x100] sm:$0xff]
  %v887 = vld [vmem:[#allocation3 + $0x108] sm:$0xff]
  %v888 = vld [vmem:[#allocation3 + $0x110] sm:$0xff]
  %v889 = vld [vmem:[#allocation3 + $0x118] sm:$0xff]
  %vm890 = vcmask 588800
  %v892 = vsel %vm890, %v853, 0
  %894 = vmatprep.subr.mxu0 0.0
  %895 = vmatpush1.msra.mxu0 0.0
  %896 = vmatprep.subr.mxu0 0.0
  %897 = vmatpush1.msra.mxu0 0.0
  %898 = vmatprep.subr.mxu0 0.0
  %899 = vmatpush1.msra.mxu0 0.0
  %900 = vmatprep.subr.mxu0 0.0
  %901 = vmatpush1.msra.mxu0 0.0
  %902 = vmatprep.subr.mxu0 0.0
  %903 = vmatpush1.msra.mxu0 0.0
  %904 = vmatprep.subr.mxu0 0.0
  %905 = vmatpush1.msra.mxu0 0.0
  %906 = vmatprep.subr.mxu0 0.0
  %907 = vmatpush1.msra.mxu0 0.0
  %908 = vmatprep.subr.mxu0 %v887
  %909 = vmatpush1.msra.mxu0 %v886
  %910 = vmatprep.subr.mxu0 %v883
  %911 = vmatpush1.msra.mxu0 %v882
  %912 = vmatprep.subr.mxu0 %v879
  %913 = vmatpush1.msra.mxu0 %v878
  %914 = vmatprep.subr.mxu0 %v875
  %915 = vmatpush1.msra.mxu0 %v874
  %916 = vmatprep.subr.mxu0 %v871
  %917 = vmatpush1.msra.mxu0 %v870
  %918 = vmatprep.subr.mxu0 %v867
  %919 = vmatpush1.msra.mxu0 %v866
  %920 = vmatprep.subr.mxu0 %v863
  %921 = vmatpush1.msra.mxu0 %v862
  %922 = vmatprep.subr.mxu0 %v859
  %923 = vmatpush1.msra.mxu0 %v858
  %924 = vmatprep.subr.mxu0 %v855
  %925 = vmatpush1.msra.mxu0 %v854
  %926 = vmatprep.subr.mxu0 0.0
  %927 = vmatpush2.msra.mxu0 0.0
  %928 = vmatprep.subr.mxu0 0.0
  %929 = vmatpush2.msra.mxu0 0.0
  %930 = vmatprep.subr.mxu0 0.0
  %931 = vmatpush2.msra.mxu0 0.0
  %932 = vmatprep.subr.mxu0 0.0
  %933 = vmatpush2.msra.mxu0 0.0
  %934 = vmatprep.subr.mxu0 0.0
  %935 = vmatpush2.msra.mxu0 0.0
  %936 = vmatprep.subr.mxu0 0.0
  %937 = vmatpush2.msra.mxu0 0.0
  %938 = vmatprep.subr.mxu0 0.0
  %939 = vmatpush2.msra.mxu0 0.0
  %940 = vmatprep.subr.mxu0 0.0
  %941 = vmatpush2.msra.mxu0 0.0
  %942 = vmatprep.subr.mxu0 0.0
  %943 = vmatpush2.msra.mxu0 0.0
  %944 = vmatprep.subr.mxu0 0.0
  %945 = vmatpush2.msra.mxu0 0.0
  %946 = vmatprep.subr.mxu0 0.0
  %947 = vmatpush2.msra.mxu0 0.0
  %948 = vmatprep.subr.mxu0 0.0
  %949 = vmatpush2.msra.mxu0 0.0
  %950 = vmatprep.subr.mxu0 0.0
  %951 = vmatpush2.msra.mxu0 0.0
  %952 = vmatprep.subr.mxu0 0.0
  %953 = vmatpush2.msra.mxu0 0.0
  %954 = vmatprep.subr.mxu0 0.0
  %955 = vmatpush2.msra.mxu0 0.0
  %956 = vmatprep.subr.mxu0 0.0
  %957 = vmatpush2.msra.mxu0 0.0
  %958 = vmatprep.mubr.f32.mxu0 0.0
  %959 = vmatmul.mubr.f32.gmra.mxu0 %v892
  %v960 = vpop.f32.mrf.mxu0
  %v961 = vadd.f32 0.0, %v960
  %v962 = vpop.f32.mrf.mxu0
  %v963 = vadd.f32 0.0, %v962
  %964 = vdwg.mxu0
  %965 = vmatprep.subr.mxu0 0.0
  %966 = vmatpush1.msra.mxu0 0.0
  %967 = vmatprep.subr.mxu0 0.0
  %968 = vmatpush1.msra.mxu0 0.0
  %969 = vmatprep.subr.mxu0 0.0
  %970 = vmatpush1.msra.mxu0 0.0
  %971 = vmatprep.subr.mxu0 0.0
  %972 = vmatpush1.msra.mxu0 0.0
  %973 = vmatprep.subr.mxu0 0.0
  %974 = vmatpush1.msra.mxu0 0.0
  %975 = vmatprep.subr.mxu0 0.0
  %976 = vmatpush1.msra.mxu0 0.0
  %977 = vmatprep.subr.mxu0 0.0
  %978 = vmatpush1.msra.mxu0 0.0
  %979 = vmatprep.subr.mxu0 %v889
  %980 = vmatpush1.msra.mxu0 %v888
  %981 = vmatprep.subr.mxu0 %v885
  %982 = vmatpush1.msra.mxu0 %v884
  %983 = vmatprep.subr.mxu0 %v881
  %984 = vmatpush1.msra.mxu0 %v880
  %985 = vmatprep.subr.mxu0 %v877
  %986 = vmatpush1.msra.mxu0 %v876
  %987 = vmatprep.subr.mxu0 %v873
  %988 = vmatpush1.msra.mxu0 %v872
  %989 = vmatprep.subr.mxu0 %v869
  %990 = vmatpush1.msra.mxu0 %v868
  %991 = vmatprep.subr.mxu0 %v865
  %992 = vmatpush1.msra.mxu0 %v864
  %993 = vmatprep.subr.mxu0 %v861
  %994 = vmatpush1.msra.mxu0 %v860
  %995 = vmatprep.subr.mxu0 %v857
  %996 = vmatpush1.msra.mxu0 %v856
  %997 = vmatprep.subr.mxu0 0.0
  %998 = vmatpush2.msra.mxu0 0.0
  %999 = vmatprep.subr.mxu0 0.0
  %1000 = vmatpush2.msra.mxu0 0.0
  %1001 = vmatprep.subr.mxu0 0.0
  %1002 = vmatpush2.msra.mxu0 0.0
  %1003 = vmatprep.subr.mxu0 0.0
  %1004 = vmatpush2.msra.mxu0 0.0
  %1005 = vmatprep.subr.mxu0 0.0
  %1006 = vmatpush2.msra.mxu0 0.0
  %1007 = vmatprep.subr.mxu0 0.0
  %1008 = vmatpush2.msra.mxu0 0.0
  %1009 = vmatprep.subr.mxu0 0.0
  %1010 = vmatpush2.msra.mxu0 0.0
  %1011 = vmatprep.subr.mxu0 0.0
  %1012 = vmatpush2.msra.mxu0 0.0
  %1013 = vmatprep.subr.mxu0 0.0
  %1014 = vmatpush2.msra.mxu0 0.0
  %1015 = vmatprep.subr.mxu0 0.0
  %1016 = vmatpush2.msra.mxu0 0.0
  %1017 = vmatprep.subr.mxu0 0.0
  %1018 = vmatpush2.msra.mxu0 0.0
  %1019 = vmatprep.subr.mxu0 0.0
  %1020 = vmatpush2.msra.mxu0 0.0
  %1021 = vmatprep.subr.mxu0 0.0
  %1022 = vmatpush2.msra.mxu0 0.0
  %1023 = vmatprep.subr.mxu0 0.0
  %1024 = vmatpush2.msra.mxu0 0.0
  %1025 = vmatprep.subr.mxu0 0.0
  %1026 = vmatpush2.msra.mxu0 0.0
  %1027 = vmatprep.subr.mxu0 0.0
  %1028 = vmatpush2.msra.mxu0 0.0
  %1029 = vmatprep.mubr.f32.mxu0 0.0
  %1030 = vmatmul.mubr.f32.gmra.mxu0 %v892
  %v1031 = vpop.f32.mrf.mxu0
  %v1032 = vadd.f32 0.0, %v1031
  %v1033 = vpop.f32.mrf.mxu0
  %v1034 = vadd.f32 0.0, %v1033
  %1035 = vdwg.mxu0
  %v1036 = vld [vmem:[%s5] sm:$0xff]
  %v1037 = vadd.f32 %v961, %v963
  %v1038 = vadd.f32 %v1037, %v1032
  %v1039 = vadd.f32 %v1038, %v1034
  %1040 = vadd.xlane.f32.xlu0 %v1039
  %v1041 = vpop.xlane.xlu0 %1040
  %v1042 = vmul.f32 %v1041, %v209
  %v1043 = vsub.f32 %v961, %v1042
  %v1044 = vsub.f32 %v963, %v1042
  %v1045 = vsub.f32 %v1032, %v1042
  %v1046 = vsub.f32 %v1034, %v1042
  %v1047 = vmul.f32 %v1043, %v1043
  %v1048 = vmul.f32 %v1044, %v1044
  %v1049 = vmul.f32 %v1045, %v1045
  %v1050 = vmul.f32 %v1046, %v1046
  %v1051 = vadd.f32 %v1047, %v1048
  %v1052 = vadd.f32 %v1051, %v1049
  %v1053 = vadd.f32 %v1052, %v1050
  %1054 = vadd.xlane.f32.xlu0 %v1053
  %v1055 = vpop.xlane.xlu0 %1054
  %v1056 = vmul.f32 %v1055, %v209
  %v1057 = vadd.f32 %v1056, 1e-05
  %v1058 = vrsqrt.pop %v1057
  %v1059 = vmul.f32 %v1058, %v1036
  %1061 = vset.pattern.permute.xlu0 2
  %1062 = vperm.xlu0 %1061, %v1059
  %v1063 = vpop.permute.xlu0 %1062
  %v1065 = vmul.f32 %v1043, %v1063
  %v1066 = vmul.f32 %v1044, %v1063
  %v1067 = vmul.f32 %v1045, %v1063
  %v1068 = vmul.f32 %v1046, %v1063
  %1070 = vset.pattern.permute.xlu0 3
  %1071 = vperm.xlu0 %1070, %v1036
  %v1072 = vpop.permute.xlu0 %1071
  %v1074 = vadd.f32 %v1065, %v1072
  %v1075 = vadd.f32 %v1066, %v1072
  %v1076 = vadd.f32 %v1067, %v1072
  %v1077 = vadd.f32 %v1068, %v1072
  %v1078 = vld [vmem:[%s1] sm:$0xff]
  %v1079 = vld [vmem:[%s1 + $0x8] sm:$0xff]
  %v1080 = vld [vmem:[%s1 + $0x10] sm:$0xff]
  %v1081 = vld [vmem:[%s1 + $0x18] sm:$0xff]
  %v1082 = vadd.f32 %v1078, %v1074
  %v1083 = vadd.f32 %v1079, %v1075
  %v1084 = vadd.f32 %v1080, %v1076
  %v1085 = vadd.f32 %v1081, %v1077
  %1086 = vst [vmem:[%s6] sm:$0xff] %v1082
  %1087 = vst [vmem:[%s6 + $0x8] sm:$0xff] %v1083
  %1088 = vst [vmem:[%s6 + $0x10] sm:$0xff] %v1084
  %1089 = vst [vmem:[%s6 + $0x18] sm:$0xff] %v1085
  // Predicated region
  $region26: #{single_block_pallas.1} parent=0 // pred_check
    _
  $region27: #{single_block_pallas.1} parent=0 // pred_check_branch
    %1091 = sbr.rel (0) target = $region29
  $region28: #{single_block_pallas.1} parent=0 // pred_region
    _
  $region29: #{single_block_pallas.1} parent=0 // pred_fallthru
    _
  // Predicated region
  $region30: #{single_block_pallas.1} parent=0 // pred_check
    _
  $region31: #{single_block_pallas.1} parent=0 // pred_check_branch
    %1093 = sbr.rel (0) target = $region33
  $region32: #{single_block_pallas.1} parent=0 // pred_region
    _
  $region33: #{single_block_pallas.1} parent=0 // pred_fallthru
    _

</llo_original>
